<compile_context>
chip_gen: v7x
topology: tpu7x:2x2x1
jax: 0.10.0
libtpu: 0.0.40
codegen_flags: <defaults>
</compile_context>

<pallas_src>
import functools
import math

import jax
import jax.numpy as jnp
from jax.experimental import pallas as pl
from jax.experimental.pallas import tpu as pltpu

# ---- module hyper-parameters (mirror the PyTorch __init__) -------------------
S = 30.0
M = 0.5
EASY_MARGIN = False
COS_M = math.cos(M)
SIN_M = math.sin(M)
TH = math.cos(math.pi - M)
MM = math.sin(math.pi - M) * M
NORM_EPS = 1e-12  # F.normalize default eps


def _round_up(x, mult):
    return ((x + mult - 1) // mult) * mult


def _arcface_kernel(x_ref, wt_ref, invx_ref, invw_ref, lab_ref, delta_ref,
                    out_ref, cos_ref, *, s):
    # x_ref : (TB, D)  bf16 -- VMEM-resident across the N grid axis (index_map (i,0))
    # wt_ref: (D, TN)  bf16 -- streamed & double-buffered, MXU-native layout
    # invx_ref: (TB,1) f32, invw_ref: (1,TN) f32, lab_ref: (TB,1) i32, delta_ref: (TB,1) f32
    raw = jax.lax.dot_general(
        x_ref[...], wt_ref[...],
        dimension_numbers=(((1,), (0,)), ((), ())),
        preferred_element_type=jnp.float32)                       # (TB, TN) f32

    cosine = raw * invx_ref[...] * invw_ref[...]                  # f32, (TB,1)*(1,TN) bcast

    tb, tn = cosine.shape
    # Global column index for the one-hot compare (grid-tiled over N).
    col = jax.lax.broadcasted_iota(jnp.int32, (tb, tn), 1) + pl.program_id(1) * tn
    is_label = col == lab_ref[...]                                # (TB, TN) bool

    out_ref[...] = (cosine * s
                    + jnp.where(is_label, delta_ref[...], 0.0)).astype(out_ref.dtype)
    cos_ref[...] = cosine.astype(cos_ref.dtype)


def arc_margin_product(x, weight, label, *,
                       s=S, m=M, easy_margin=EASY_MARGIN,
                       matmul_dtype=jnp.bfloat16,
                       cosine_dtype=jnp.float32,
                       tile_b=1024, tile_n=1024):
    """x: (B, D) f32, weight: (N, D) f32, label: (B,) int -> (output, cosine)."""
    B, D = x.shape
    N, D2 = weight.shape
    assert D == D2, "in_features mismatch"

    cos_m = math.cos(m)
    sin_m = math.sin(m)
    th = math.cos(math.pi - m)
    mm_ = math.sin(math.pi - m) * m
    eps2 = NORM_EPS * NORM_EPS

    # ---- wrapper-side precompute (hoisted out of the hot per-tile loop) ------
    # f32 inverse L2 norms (the bf16 cast below never touches the norms).
    inv_x = jax.lax.rsqrt(
        jnp.maximum(jnp.sum(x * x, axis=1, keepdims=True), eps2))       # (B, 1)
    inv_w = jax.lax.rsqrt(
        jnp.maximum(jnp.sum(weight * weight, axis=1), eps2))            # (N,)

    # One-time bf16 copies for the MXU stream (halves HBM bytes of the weight read).
    x_mm = x.astype(matmul_dtype)                                        # (B, D)
    w_mm = weight.astype(matmul_dtype)                                   # (N, D)

    # Per-row margin delta on the label column only: O(B*D) total, done once here.
    # Uses the same bf16-rounded operands as the in-kernel matmul.
    lab = label.astype(jnp.int32)
    w_lab = jnp.take(w_mm, lab, axis=0).astype(jnp.float32)              # (B, D)
    cos_y = (jnp.sum(x_mm.astype(jnp.float32) * w_lab, axis=1, keepdims=True)
             * inv_x * jnp.take(inv_w, lab)[:, None])                    # (B, 1)
    sin_y = jnp.sqrt(jnp.clip(1.001 - cos_y * cos_y, 0.0, 1.0))          # matches PyTorch's 1.001
    phi_y = cos_y * cos_m - sin_y * sin_m
    if easy_margin:
        phi_y = jnp.where(cos_y > 0.0, phi_y, cos_y)
    else:
        phi_y = jnp.where(cos_y > th, phi_y, cos_y - mm_)
    delta = (phi_y - cos_y) * float(s)                                   # (B, 1)

    # ---- tiling / padding -----------------------------------------------------
    # Sublane-aligned batch tile (big -> weight streamed as few times as possible),
    # lane-dense class tile (multiple of 128).
    TILE_B = min(tile_b, _round_up(B, 8))
    TILE_N = min(tile_n, _round_up(N, 128))
    B_pad = _round_up(B, TILE_B)
    N_pad = _round_up(N, TILE_N)

    x_p = x_mm if B_pad == B else jnp.pad(x_mm, ((0, B_pad - B), (0, 0)))
    # Weight stored transposed (D, N_pad): MXU-native contraction, no per-tile vxpose.
    wt_p = w_mm.T
    if N_pad != N:
        wt_p = jnp.pad(wt_p, ((0, 0), (0, N_pad - N)))
    # Pad inv norms with ZEROS -> padded rows/columns yield cosine exactly 0
    # (avoids the fragile 1/eps=1e12 path on padded weight rows).
    invx_p = inv_x if B_pad == B else jnp.pad(inv_x, ((0, B_pad - B), (0, 0)))
    invw_p = inv_w if N_pad == N else jnp.pad(inv_w, (0, N_pad - N))
    invw_row = invw_p.reshape(1, N_pad)
    lab_p = lab if B_pad == B else jnp.pad(lab, (0, B_pad - B))
    lab2d = lab_p.reshape(B_pad, 1)
    delta_p = delta if B_pad == B else jnp.pad(delta, ((0, B_pad - B), (0, 0)))

    grid = (B_pad // TILE_B, N_pad // TILE_N)

    kernel = functools.partial(_arcface_kernel, s=float(s))

    out, cosine = pl.pallas_call(
        kernel,
        grid=grid,
        in_specs=[
            # x tile stays resident across the N axis (same block for all j).
            pl.BlockSpec((TILE_B, D), lambda i, j: (i, 0)),
            # transposed weight streams along the N axis, double-buffered.
            # (pipeline_mode=pl.Buffered(3) only if a trace shows exposed DMA.)
            pl.BlockSpec((D, TILE_N), lambda i, j: (0, j)),
            pl.BlockSpec((TILE_B, 1), lambda i, j: (i, 0)),      # inv_x
            pl.BlockSpec((1, TILE_N), lambda i, j: (0, j)),      # inv_w
            pl.BlockSpec((TILE_B, 1), lambda i, j: (i, 0)),      # label
            pl.BlockSpec((TILE_B, 1), lambda i, j: (i, 0)),      # delta
        ],
        out_specs=(
            pl.BlockSpec((TILE_B, TILE_N), lambda i, j: (i, j)),
            pl.BlockSpec((TILE_B, TILE_N), lambda i, j: (i, j)),
        ),
        out_shape=(
            jax.ShapeDtypeStruct((B_pad, N_pad), jnp.float32),
            jax.ShapeDtypeStruct((B_pad, N_pad), cosine_dtype),
        ),
        compiler_params=pltpu.CompilerParams(
            # Both axes independent (no accumulation) -> megacore-shardable on v7x.
            dimension_semantics=("parallel", "parallel"),
            # Fits the 1024x1024 default tiles (~20-25 MiB double-buffered) with
            # headroom under v7x's 64 MiB physical VMEM.
            vmem_limit_bytes=48 * 1024 * 1024,
        ),
    )(x_p, wt_p, invx_p, invw_row, lab2d, delta_p)

    # Slice padding off (columns >= N and rows >= B are padding).
    return out[:B, :N], cosine[:B, :N]


def init_weight(key, out_features, in_features):
    # nn.init.xavier_uniform_: U(-a, a), a = sqrt(6 / (fan_in + fan_out))
    bound = math.sqrt(6.0 / (in_features + out_features))
    return jax.random.uniform(
        key, (out_features, in_features), jnp.float32, -bound, bound)


if __name__ == "__main__":
    # NOTE: the PyTorch forward hard-codes one_hot with 10 columns, so
    # out_features must be 10 for that broadcast to be valid — we honor that.
    B = 8
    IN_FEATURES = 32
    OUT_FEATURES = 10

    key = jax.random.PRNGKey(0)
    kx, kw, kl = jax.random.split(key, 3)

    x = jax.random.normal(kx, (B, IN_FEATURES), jnp.float32)
    weight = init_weight(kw, OUT_FEATURES, IN_FEATURES)
    label = jax.random.randint(kl, (B,), 0, OUT_FEATURES, jnp.int32)

    output, cosine = arc_margin_product(x, weight, label)
    jax.block_until_ready((output, cosine))

    # --- reference 1: mirrors the kernel's bf16 MXU matmul (tight tolerance) ---
    eps2 = NORM_EPS * NORM_EPS
    inv_x = jax.lax.rsqrt(jnp.maximum(jnp.sum(x * x, axis=1, keepdims=True), eps2))
    inv_w = jax.lax.rsqrt(jnp.maximum(jnp.sum(weight * weight, axis=1, keepdims=True), eps2))
    raw = jnp.dot(x.astype(jnp.bfloat16), weight.astype(jnp.bfloat16).T,
                  preferred_element_type=jnp.float32)
    cos_ref = raw * inv_x * inv_w.T
    sin_ref = jnp.sqrt(jnp.clip(1.001 - cos_ref ** 2, 0.0, 1.0))
    phi_ref = cos_ref * COS_M - sin_ref * SIN_M
    phi_ref = jnp.where(cos_ref > TH, phi_ref, cos_ref - MM)
    oh = jax.nn.one_hot(label, OUT_FEATURES, dtype=jnp.float32)
    out_ref = (oh * phi_ref + (1.0 - oh) * cos_ref) * S
    assert jnp.allclose(cosine.astype(jnp.float32), cos_ref, atol=2e-3), \
        "cosine mismatch vs bf16-matched ref"
    assert jnp.allclose(output, out_ref, atol=5e-2), \
        "output mismatch vs bf16-matched ref"

    # --- reference 2: full-f32 ArcFace cosine (loose, bounds the bf16 error) ---
    x_n = x / jnp.maximum(jnp.linalg.norm(x, axis=1, keepdims=True), NORM_EPS)
    w_n = weight / jnp.maximum(jnp.linalg.norm(weight, axis=1, keepdims=True), NORM_EPS)
    cos_f32 = x_n @ w_n.T
    assert jnp.allclose(cosine.astype(jnp.float32), cos_f32, atol=2e-2), \
        "cosine far from f32 reference"

    print("KERNEL_OK")
</pallas_src>

<mosaic_0001>
module attributes {stable_mosaic.version = 11 : i64} {
  func.func @_arcface_kernel(%arg0: i32, %arg1: i32, %arg2: memref<8x32xbf16, #tpu.memory_space<vmem>>, %arg3: memref<32x128xbf16, #tpu.memory_space<vmem>>, %arg4: memref<8x1xf32, #tpu.memory_space<vmem>>, %arg5: memref<1x128xf32, #tpu.memory_space<vmem>>, %arg6: memref<8x1xi32, #tpu.memory_space<vmem>>, %arg7: memref<8x1xf32, #tpu.memory_space<vmem>>, %arg8: memref<8x128xf32, #tpu.memory_space<vmem>>, %arg9: memref<8x128xf32, #tpu.memory_space<vmem>>) attributes {dimension_semantics = [#tpu.dimension_semantics<parallel>, #tpu.dimension_semantics<parallel>], iteration_bounds = array<i64: 1, 1>, scalar_prefetch = 0 : i64, scratch_operands = 0 : i64, tpu.core_type = #tpu.core_type<tc>, window_params = [{transform_indices = @transform_0, window_bounds = array<i64: 8, 32>}, {transform_indices = @transform_1, window_bounds = array<i64: 32, 128>}, {transform_indices = @transform_2, window_bounds = array<i64: 8, 1>}, {transform_indices = @transform_3, window_bounds = array<i64: 1, 128>}, {transform_indices = @transform_4, window_bounds = array<i64: 8, 1>}, {transform_indices = @transform_5, window_bounds = array<i64: 8, 1>}, {transform_indices = @transform_6, window_bounds = array<i64: 8, 128>}, {transform_indices = @transform_7, window_bounds = array<i64: 8, 128>}]} {
    %c0 = arith.constant 0 : index
    %c0_0 = arith.constant 0 : index
    %0 = vector.load %arg2[%c0, %c0_0] : memref<8x32xbf16, #tpu.memory_space<vmem>>, vector<8x32xbf16>
    %c0_1 = arith.constant 0 : index
    %c0_2 = arith.constant 0 : index
    %1 = vector.load %arg3[%c0_1, %c0_2] : memref<32x128xbf16, #tpu.memory_space<vmem>>, vector<32x128xbf16>
    %cst = arith.constant dense<0.000000e+00> : vector<8x128xf32>
    %2 = tpu.matmul %0, %1, %cst {dimension_numbers = #tpu.dot_dimension_numbers<[1], [0], [0], [1], [0, 0, 1, 1], [], []>} : vector<8x32xbf16>, vector<32x128xbf16>, vector<8x128xf32> -> vector<8x128xf32>
    %c0_3 = arith.constant 0 : index
    %c0_4 = arith.constant 0 : index
    %3 = vector.load %arg4[%c0_3, %c0_4] : memref<8x1xf32, #tpu.memory_space<vmem>>, vector<8x1xf32>
    %4 = vector.broadcast %3 : vector<8x1xf32> to vector<8x128xf32>
    %5 = arith.mulf %2, %4 : vector<8x128xf32>
    %c0_5 = arith.constant 0 : index
    %c0_6 = arith.constant 0 : index
    %6 = vector.load %arg5[%c0_5, %c0_6] : memref<1x128xf32, #tpu.memory_space<vmem>>, vector<1x128xf32>
    %7 = vector.broadcast %6 : vector<1x128xf32> to vector<8x128xf32>
    %8 = arith.mulf %5, %7 : vector<8x128xf32>
    %9 = tpu.iota {dimensions = array<i32: 1>} : vector<8x128xi32>
    %c128_i32 = arith.constant 128 : i32
    %10 = arith.muli %arg1, %c128_i32 : i32
    %11 = vector.broadcast %10 : i32 to vector<8x128xi32>
    %12 = arith.addi %9, %11 : vector<8x128xi32>
    %c0_7 = arith.constant 0 : index
    %c0_8 = arith.constant 0 : index
    %13 = vector.load %arg6[%c0_7, %c0_8] : memref<8x1xi32, #tpu.memory_space<vmem>>, vector<8x1xi32>
    %14 = vector.broadcast %13 : vector<8x1xi32> to vector<8x128xi32>
    %15 = arith.cmpi eq, %12, %14 : vector<8x128xi32>
    %cst_9 = arith.constant 3.000000e+01 : f32
    %16 = vector.broadcast %cst_9 : f32 to vector<8x128xf32>
    %17 = arith.mulf %8, %16 : vector<8x128xf32>
    %c0_10 = arith.constant 0 : index
    %c0_11 = arith.constant 0 : index
    %18 = vector.load %arg7[%c0_10, %c0_11] : memref<8x1xf32, #tpu.memory_space<vmem>>, vector<8x1xf32>
    %cst_12 = arith.constant 0.000000e+00 : f32
    %19 = vector.shape_cast %18 : vector<8x1xf32> to vector<8x1xf32>
    %20 = vector.broadcast %19 : vector<8x1xf32> to vector<8x128xf32>
    %21 = vector.broadcast %cst_12 : f32 to vector<8x128xf32>
    %22 = arith.select %15, %20, %21 : vector<8x128xi1>, vector<8x128xf32>
    %23 = arith.addf %17, %22 : vector<8x128xf32>
    %c0_13 = arith.constant 0 : index
    %c0_14 = arith.constant 0 : index
    %24 = vector.load %arg8[%c0_13, %c0_14] : memref<8x128xf32, #tpu.memory_space<vmem>>, vector<8x128xf32>
    tpu.vector_store %arg8[%c0_13, %c0_14], %23 {strides = array<i32>} : memref<8x128xf32, #tpu.memory_space<vmem>>, vector<8x128xf32>,
    %c0_15 = arith.constant 0 : index
    %c0_16 = arith.constant 0 : index
    %25 = vector.load %arg9[%c0_15, %c0_16] : memref<8x128xf32, #tpu.memory_space<vmem>>, vector<8x128xf32>
    tpu.vector_store %arg9[%c0_15, %c0_16], %8 {strides = array<i32>} : memref<8x128xf32, #tpu.memory_space<vmem>>, vector<8x128xf32>,
    return
  }
  func.func @transform_0(%arg0: i32, %arg1: i32) -> (i32, i32) {
    %c0_i32 = arith.constant 0 : i32
    %c0_i32_0 = arith.constant 0 : i32
    return %arg0, %c0_i32 : i32, i32
  }
  func.func @transform_1(%arg0: i32, %arg1: i32) -> (i32, i32) {
    %c0_i32 = arith.constant 0 : i32
    %c0_i32_0 = arith.constant 0 : i32
    return %c0_i32, %arg1 : i32, i32
  }
  func.func @transform_2(%arg0: i32, %arg1: i32) -> (i32, i32) {
    %c0_i32 = arith.constant 0 : i32
    %c0_i32_0 = arith.constant 0 : i32
    return %arg0, %c0_i32 : i32, i32
  }
  func.func @transform_3(%arg0: i32, %arg1: i32) -> (i32, i32) {
    %c0_i32 = arith.constant 0 : i32
    %c0_i32_0 = arith.constant 0 : i32
    return %c0_i32, %arg1 : i32, i32
  }
  func.func @transform_4(%arg0: i32, %arg1: i32) -> (i32, i32) {
    %c0_i32 = arith.constant 0 : i32
    %c0_i32_0 = arith.constant 0 : i32
    return %arg0, %c0_i32 : i32, i32
  }
  func.func @transform_5(%arg0: i32, %arg1: i32) -> (i32, i32) {
    %c0_i32 = arith.constant 0 : i32
    %c0_i32_0 = arith.constant 0 : i32
    return %arg0, %c0_i32 : i32, i32
  }
  func.func @transform_6(%arg0: i32, %arg1: i32) -> (i32, i32) {
    %c0_i32 = arith.constant 0 : i32
    return %arg0, %arg1 : i32, i32
  }
  func.func @transform_7(%arg0: i32, %arg1: i32) -> (i32, i32) {
    %c0_i32 = arith.constant 0 : i32
    return %arg0, %arg1 : i32, i32
  }
}

</mosaic_0001>

<llo_original>
// kernel: tpu_custom_call.1
$region0: #{tpu_custom_call.1}
  #allocation0 [shape = 'u32[]', space=smem, size = 0x4, offset = 0x4, fixed_abs, tag = 'smem constant byte address 0x4 - core index']
  #allocation1 [shape = 'u32[144,128]{1,0:T(1,128)}', space=vmem, size = 0x12000, scoped, tag = 'internal scratch']
  %s0 = inlined_call_operand.vmem [shape: bf16[8,32], index: 0, kind: input, shape index: {}]
  %s1 = inlined_call_operand.vmem [shape: bf16[32,128], index: 1, kind: input, shape index: {}]
  %s2 = inlined_call_operand.vmem [shape: f32[8,1], index: 2, kind: input, shape index: {}]
  %s3 = inlined_call_operand.vmem [shape: f32[1,128], index: 3, kind: input, shape index: {}]
  %s4 = inlined_call_operand.vmem [shape: s32[8,1], index: 4, kind: input, shape index: {}]
  %s5 = inlined_call_operand.vmem [shape: f32[8,1], index: 5, kind: input, shape index: {}]
  %s6 = inlined_call_operand.hbm [shape: f32[8,128], index: 6, kind: output, shape index: {0}]
  %s7 = inlined_call_operand.hbm [shape: f32[8,128], index: 7, kind: output, shape index: {1}]
  %8 = xla_tuple %s6, %s7
  %s9 = sld [smem:[#allocation0]]
  $region42: #{tpu_custom_call.1} parent=0
    _
  %s11 = ssub.s32 1, %s9
  %s12 = scalar_select 0, %s11, %s9
  $region1: #{tpu_custom_call.1} parent=0
    #allocation2 [shape = 'u8[4096]{0}', space=vmem, size = 0x1000, scoped, tag = 'output window, operand 0, single buffered']
    #allocation3 [shape = 's32[1]{0}', space=sflag, size = 0x4, scoped, tag = 'scoped memory for tpu_custom_call.1']
    #allocation4 [shape = 'u8[4096]{0}', space=vmem, size = 0x1000, scoped, tag = 'output window, operand 1, single buffered']
    #allocation5 [shape = 's32[1]{0}', space=sflag, size = 0x4, scoped, tag = 'scoped memory for tpu_custom_call.1']
    %13 = vsyncpa [#allocation3], 0
    %14 = vsyncpa [#allocation5], 0
    // Predicated region
    $region2: #{tpu_custom_call.1} parent=1 // pred_check
      _
    $region3: #{tpu_custom_call.1} parent=1 // pred_check_branch
      %16 = sbr.rel (0) target = $region5
    $region4: #{tpu_custom_call.1} parent=1 // pred_region
      _
    $region5: #{tpu_custom_call.1} parent=1 // pred_fallthru
      _
    // Predicated region
    $region6: #{tpu_custom_call.1} parent=1 // pred_check
      _
    $region7: #{tpu_custom_call.1} parent=1 // pred_check_branch
      %18 = sbr.rel (0) target = $region9
    $region8: #{tpu_custom_call.1} parent=1 // pred_region
      _
    $region9: #{tpu_custom_call.1} parent=1 // pred_fallthru
      _
    // Predicated region
    $region10: #{tpu_custom_call.1} parent=1 // pred_check
      _
    $region11: #{tpu_custom_call.1} parent=1 // pred_check_branch
      %20 = sbr.rel (0) target = $region13
    $region12: #{tpu_custom_call.1} parent=1 // pred_region
      _
    $region13: #{tpu_custom_call.1} parent=1 // pred_fallthru
      _
    // Predicated region
    $region14: #{tpu_custom_call.1} parent=1 // pred_check
      _
    $region15: #{tpu_custom_call.1} parent=1 // pred_check_branch
      %22 = sbr.rel (0) target = $region17
    $region16: #{tpu_custom_call.1} parent=1 // pred_region
      _
    $region17: #{tpu_custom_call.1} parent=1 // pred_fallthru
      _
    // Predicated region
    $region18: #{tpu_custom_call.1} parent=1 // pred_check
      _
    $region19: #{tpu_custom_call.1} parent=1 // pred_check_branch
      %24 = sbr.rel (0) target = $region21
    $region20: #{tpu_custom_call.1} parent=1 // pred_region
      _
    $region21: #{tpu_custom_call.1} parent=1 // pred_fallthru
      _
    // Predicated region
    $region22: #{tpu_custom_call.1} parent=1 // pred_check
      _
    $region23: #{tpu_custom_call.1} parent=1 // pred_check_branch
      %26 = sbr.rel (0) target = $region25
    $region24: #{tpu_custom_call.1} parent=1 // pred_region
      _
    $region25: #{tpu_custom_call.1} parent=1 // pred_fallthru
      _
    %v28 = vld [vmem:[%s0] sm:$0xf]
    %v29 = vld [vmem:[%s1] sm:$0xf]
    %v30 = vld [vmem:[%s1 + $0x4] sm:$0xf]
    %v31 = vld [vmem:[%s1 + $0x8] sm:$0xf]
    %v32 = vld [vmem:[%s1 + $0xc] sm:$0xf]
    %v37 = vunpack.c.l.b16 %v29
    %v38 = vunpack.c.l.b16 %v30
    %v39 = vunpack.c.l.b16 %v31
    %v40 = vunpack.c.l.b16 %v32
    %v41 = vpack.c.b16 %v38, %v37
    %v42 = vpack.c.b16 %v40, %v39
    %vm45 = vcmask 261120
    %v47 = vsel %vm45, %v28, 0
    %49 = vmatprep.subr.bf16.mxu0 0
    %50 = vmatpush1.bf16.msra.mxu0 %v41
    %51 = vmatprep.subr.bf16.mxu0 0
    %52 = vmatpush1.bf16.msra.mxu0 %v42
    %53 = vmatprep.subr.bf16.mxu0 0
    %54 = vmatpush1.bf16.msra.mxu0 0
    %55 = vmatprep.subr.bf16.mxu0 0
    %56 = vmatpush1.bf16.msra.mxu0 0
    %57 = vmatprep.subr.bf16.mxu0 0
    %58 = vmatpush1.bf16.msra.mxu0 0
    %59 = vmatprep.subr.bf16.mxu0 0
    %60 = vmatpush1.bf16.msra.mxu0 0
    %61 = vmatprep.subr.bf16.mxu0 0
    %62 = vmatpush1.bf16.msra.mxu0 0
    %63 = vmatprep.subr.bf16.mxu0 0
    %64 = vmatpush1.bf16.msra.mxu0 0
    %65 = vmatprep.subr.bf16.mxu0 0
    %66 = vmatpush1.bf16.msra.mxu0 0
    %67 = vmatprep.subr.bf16.mxu0 0
    %68 = vmatpush1.bf16.msra.mxu0 0
    %69 = vmatprep.subr.bf16.mxu0 0
    %70 = vmatpush1.bf16.msra.mxu0 0
    %71 = vmatprep.subr.bf16.mxu0 0
    %72 = vmatpush1.bf16.msra.mxu0 0
    %73 = vmatprep.subr.bf16.mxu0 0
    %74 = vmatpush1.bf16.msra.mxu0 0
    %75 = vmatprep.subr.bf16.mxu0 0
    %76 = vmatpush1.bf16.msra.mxu0 0
    %77 = vmatprep.subr.bf16.mxu0 0
    %78 = vmatpush1.bf16.msra.mxu0 0
    %79 = vmatprep.subr.bf16.mxu0 0
    %80 = vmatpush1.bf16.msra.mxu0 0
    %81 = vmatprep.mubr.bf16.mxu0 0
    %82 = vmatmul.mubr.bf16.gmra.mrb[0].mxu0 %v47
    %v83 = vpop.f32.mrb[0].mxu0
    %v84 = vadd.f32 0.0, %v83
    %v85 = vpop.f32.mrb[0].mxu0
    %v86 = vpop.f32.mrb[0].mxu0
    %v87 = vpop.f32.mrb[0].mxu0
    %88 = vdwg.mxu0
    %v89 = vld [vmem:[%s2] sm:$0xff]
    %91 = vset.pattern.permute.xlu0 0
    %92 = vperm.xlu0 %91, %v89
    %v93 = vpop.permute.xlu0 %92
    %v95 = vmul.f32 %v84, %v93
    %v96 = vld [vmem:[%s3] sm:$0x1]
    %v98 = vlaneseq
    %v99 = vshrl.u32 %v98, 7
    %v100 = vsub.s32 0, %v99
    %v101 = vrot.slane %v96, %v100
    %v103 = vmul.f32 %v95, %v101
    %v104 = vlaneseq
    %v105 = vand.u32 %v104, 127
    %s106 = smul.u32 0, 128
    %v107 = vstv %s106
    %v108 = vadd.s32 %v105, %v107
    %v109 = vld [vmem:[%s4] sm:$0xff]
    %110 = vset.pattern.permute.xlu0 0
    %111 = vperm.xlu0 %110, %v109
    %v112 = vpop.permute.xlu0 %111
    %vm113 = vcmp.eq.s32.totalorder %v108, %v112
    %v114 = vmul.f32 %v103, 30.0
    %v115 = vld [vmem:[%s5] sm:$0xff]
    %117 = vset.pattern.permute.xlu0 0
    %118 = vperm.xlu0 %117, %v115
    %v119 = vpop.permute.xlu0 %118
    %v121 = vsel %vm113, %v119, 0.0
    %v122 = vadd.f32 %v114, %v121
    %123 = vst [vmem:[#allocation2] sm:$0xff] %v122
    %124 = vst [vmem:[#allocation4] sm:$0xff] %v103
    // Predicated region
    $region26: #{tpu_custom_call.1} parent=1 // pred_check
      _
    $region27: #{tpu_custom_call.1} parent=1 // pred_check_branch
      %126 = sbr.rel (0) target = $region29
    $region28: #{tpu_custom_call.1} parent=1 // pred_region
      %s128 = ssub.s32 128, 128
      %129 = vsyncadd [#allocation3], %s128
      %s131 = sshll.u32 [#allocation2], 4
      %s132 = int_to_ptr.vmem [resolvable:$true] %s131
      %134 = dma.vmem_to_hbm [thread:$0]  %s132, 128, %s6, [#allocation3]
    $region29: #{tpu_custom_call.1} parent=1 // pred_fallthru
      _
    // Predicated region
    $region30: #{tpu_custom_call.1} parent=1 // pred_check
      _
    $region31: #{tpu_custom_call.1} parent=1 // pred_check_branch
      %136 = sbr.rel (0) target = $region33
    $region32: #{tpu_custom_call.1} parent=1 // pred_region
      %s138 = ssub.s32 128, 128
      %139 = vsyncadd [#allocation5], %s138
      %s141 = sshll.u32 [#allocation4], 4
      %s142 = int_to_ptr.vmem [resolvable:$true] %s141
      %144 = dma.vmem_to_hbm [thread:$0]  %s142, 128, %s7, [#allocation5]
    $region33: #{tpu_custom_call.1} parent=1 // pred_fallthru
      _
    // Predicated region
    $region34: #{tpu_custom_call.1} parent=1 // pred_check
      _
    $region35: #{tpu_custom_call.1} parent=1 // pred_check_branch
      %146 = sbr.rel (0) target = $region37
    $region36: #{tpu_custom_call.1} parent=1 // pred_region
      %147 = dma.done [#allocation3], 128
    $region37: #{tpu_custom_call.1} parent=1 // pred_fallthru
      _
    // Predicated region
    $region38: #{tpu_custom_call.1} parent=1 // pred_check
      _
    $region39: #{tpu_custom_call.1} parent=1 // pred_check_branch
      %149 = sbr.rel (0) target = $region41
    $region40: #{tpu_custom_call.1} parent=1 // pred_region
      %150 = dma.done [#allocation5], 128
    $region41: #{tpu_custom_call.1} parent=1 // pred_fallthru
      _
    %151 = vsyncpa [#allocation3], 1
    %152 = vsyncpa [#allocation5], 1

</llo_original>
